<compile_context>
chip_gen: v6e
topology: v6e:2x2x1
jax: 0.10.0
libtpu: 0.0.40
codegen_flags: <defaults>
</compile_context>

<pallas_src>
import math

import jax
import jax.numpy as jnp
from jax.experimental import pallas as pl
from jax.experimental.pallas import tpu as pltpu

_MAX_LANES = 1024                        # preferred lane-dense slab width
_TARGET_BLOCK_BYTES = 4 * 1024 * 1024    # ~4 MiB per pipelined block
_VMEM_LIMIT_BYTES = 48 * 1024 * 1024     # explicit scoped-VMEM limit (all gens)
_SMALL_BYTES = 256 * 1024                # unaligned tensors up to this -> 1 block


def _f2c_train_kernel(freq_ref, out_ref):
    # counter = frequency / 10 - 1   (true division)
    x = freq_ref[...].astype(jnp.float32)
    out_ref[...] = (x / 10.0 - 1.0).astype(out_ref.dtype)


def _f2c_eval_kernel(freq_ref, out_ref):
    # counter = frequency // 10 - 1  (floor division, rounds toward -inf)
    x = freq_ref[...].astype(jnp.float32)
    out_ref[...] = (jnp.floor(x / 10.0) - 1.0).astype(out_ref.dtype)


def _pick_lanes(n: int) -> int:
    """Largest multiple-of-128 divisor of n, capped at _MAX_LANES (0 if none)."""
    c = min(_MAX_LANES, n)
    c -= c % 128
    while c >= 128:
        if n % c == 0:
            return c
        c -= 128
    return 0


def _f2c_2d(x2d: jax.Array, is_train: bool) -> jax.Array:
    """Run the elementwise kernel over a 2-D slab (rows, lanes).

    Legal whenever lanes % 128 == 0 (tiled fast path) or the block covers the
    full array (small path): block dims are always either multiples of the
    native (8/16, 128) tile or equal to the full array extent.
    """
    rows, lanes = x2d.shape
    dtype = x2d.dtype
    itemsize = dtype.itemsize
    sublane = max(8, 32 // itemsize)      # 8 for f32, 16 for bf16/f16, 32 for 8-bit

    if rows <= sublane:
        tile_rows = rows                  # single, full-extent block
    else:
        # ~4 MiB blocks, rounded down to a sublane multiple ...
        cap = max(sublane,
                  (_TARGET_BLOCK_BYTES // (lanes * itemsize)) // sublane * sublane)
        # ... but always >= 2 grid steps so both v7x TensorCores get work.
        half = pl.cdiv(pl.cdiv(rows, 2), sublane) * sublane
        tile_rows = min(cap, half)
    grid = (pl.cdiv(rows, tile_rows),)

    n = rows * lanes
    kernel = _f2c_train_kernel if is_train else _f2c_eval_kernel

    return pl.pallas_call(
        kernel,
        out_shape=jax.ShapeDtypeStruct((rows, lanes), dtype),
        grid_spec=pltpu.PrefetchScalarGridSpec(
            num_scalar_prefetch=0,
            grid=grid,
            in_specs=[pl.BlockSpec((tile_rows, lanes), lambda i: (i, 0))],
            out_specs=pl.BlockSpec((tile_rows, lanes), lambda i: (i, 0)),
        ),
        compiler_params=pltpu.CompilerParams(
            dimension_semantics=("parallel",),
            vmem_limit_bytes=_VMEM_LIMIT_BYTES,
        ),
        input_output_aliases={0: 0},
        cost_estimate=pl.CostEstimate(
            flops=2 * n, transcendentals=0, bytes_accessed=2 * n * itemsize),
    )(x2d)


def f2c(frequency: jax.Array, is_train: bool) -> jax.Array:
    """Pallas implementation of F2C.forward (`is_train` is a Python bool)."""
    frequency = jnp.asarray(frequency)
    dtype = frequency.dtype

    if not jnp.issubdtype(dtype, jnp.floating):
        # Integer/bool inputs: keep torch's type promotion exactly (true div
        # promotes to float, floor div stays integral).  Not the hot path.
        return frequency / 10 - 1 if is_train else frequency // 10 - 1

    orig_shape = frequency.shape
    n = math.prod(orig_shape)
    if n == 0:
        return frequency

    itemsize = dtype.itemsize

    if n % 128 == 0:
        # Fast path: lane-dense slab, zero padding, zero extra HBM passes.
        lanes = _pick_lanes(n)
        out = _f2c_2d(frequency.reshape(n // lanes, lanes), is_train)
        return out.reshape(orig_shape)

    if n * itemsize <= _SMALL_BYTES:
        # Small & lane-unaligned: one full-array block, still zero padding.
        out = _f2c_2d(frequency.reshape(1, n), is_train)
        return out.reshape(orig_shape)

    # Large & lane-unaligned (rare): stream the 128-aligned prefix through the
    # kernel and finish the (<128-element) tail with plain jnp -- cheaper than
    # padding + slicing back, which would add two full-tensor HBM passes.
    flat = frequency.reshape(-1)
    n_main = (n // 128) * 128
    lanes = _pick_lanes(n_main)
    head = _f2c_2d(flat[:n_main].reshape(n_main // lanes, lanes),
                   is_train).reshape(-1)
    tail = flat[n_main:]
    tail = (tail / 10.0 - 1.0) if is_train else (jnp.floor(tail / 10.0) - 1.0)
    return jnp.concatenate([head, tail.astype(dtype)]).reshape(orig_shape)


class F2C:
    """Mirror of the PyTorch module's interface."""

    def __call__(self, frequency, is_train):
        return self.forward(frequency, is_train)

    def forward(self, frequency, is_train):
        return f2c(frequency, bool(is_train))


def _f2c_reference(frequency, is_train):
    if is_train:
        return frequency / 10.0 - 1.0
    return jnp.floor(frequency / 10.0) - 1.0


if __name__ == "__main__":
    key = jax.random.PRNGKey(0)
    k0, k1, k2, k3 = jax.random.split(key, 4)

    module = F2C()

    # NCHW "frequency" tensor (aligned fast path: 2048 elements).
    freq = jax.random.uniform(k0, (2, 4, 16, 16), jnp.float32, 0.0, 100.0)
    # Oddly-shaped tensor with negatives: small unaligned single-block path,
    # exercises floor semantics for negative values.
    freq_odd = jax.random.uniform(k1, (3, 5, 7), jnp.float32, -100.0, 100.0)
    # Larger aligned tensor: multi-step "parallel" grid (>= 2 blocks).
    freq_big = jax.random.uniform(k2, (4, 4, 32, 32), jnp.float32, 0.0, 100.0)
    # Larger lane-unaligned tensor: aligned-prefix + jnp tail path.
    freq_rag = jax.random.uniform(k3, (3, 21851), jnp.float32, -50.0, 50.0)

    cases = [("nchw", freq), ("odd", freq_odd), ("big", freq_big), ("ragged", freq_rag)]
    for name, x in cases:
        for is_train in (True, False):
            out = jax.block_until_ready(module(x, is_train))
            ref = _f2c_reference(x, is_train)
            assert out.shape == x.shape and out.dtype == x.dtype, (name, is_train)
            assert jnp.allclose(out, ref, atol=1e-5, rtol=1e-5), (name, is_train)

    print("KERNEL_OK")
</pallas_src>

<mosaic_0001>
module attributes {stable_mosaic.version = 11 : i64} {
  func.func @_f2c_train_kernel(%arg0: i32, %arg1: memref<2x1024xf32, #tpu.memory_space<vmem>>, %arg2: memref<2x1024xf32, #tpu.memory_space<vmem>>) attributes {dimension_semantics = [#tpu.dimension_semantics<parallel>], iteration_bounds = array<i64: 1>, scalar_prefetch = 0 : i64, scratch_operands = 0 : i64, tpu.core_type = #tpu.core_type<tc>, window_params = [{transform_indices = @transform_0, window_bounds = array<i64: 2, 1024>}, {transform_indices = @transform_1, window_bounds = array<i64: 2, 1024>}]} {
    %c0 = arith.constant 0 : index
    %c0_0 = arith.constant 0 : index
    %0 = vector.load %arg1[%c0, %c0_0] : memref<2x1024xf32, #tpu.memory_space<vmem>>, vector<2x1024xf32>
    %cst = arith.constant 1.000000e+01 : f32
    %1 = vector.broadcast %cst : f32 to vector<2x1024xf32>
    %2 = arith.divf %0, %1 : vector<2x1024xf32>
    %cst_1 = arith.constant 1.000000e+00 : f32
    %3 = vector.broadcast %cst_1 : f32 to vector<2x1024xf32>
    %4 = arith.subf %2, %3 : vector<2x1024xf32>
    %c0_2 = arith.constant 0 : index
    %c0_3 = arith.constant 0 : index
    %5 = vector.load %arg2[%c0_2, %c0_3] : memref<2x1024xf32, #tpu.memory_space<vmem>>, vector<2x1024xf32>
    tpu.vector_store %arg2[%c0_2, %c0_3], %4 {strides = array<i32>} : memref<2x1024xf32, #tpu.memory_space<vmem>>, vector<2x1024xf32>,
    return
  }
  func.func @transform_0(%arg0: i32) -> (i32, i32) {
    %c0_i32 = arith.constant 0 : i32
    %c0_i32_0 = arith.constant 0 : i32
    return %arg0, %c0_i32 : i32, i32
  }
  func.func @transform_1(%arg0: i32) -> (i32, i32) {
    %c0_i32 = arith.constant 0 : i32
    %c0_i32_0 = arith.constant 0 : i32
    return %arg0, %c0_i32 : i32, i32
  }
}

</mosaic_0001>

<llo_original>
// kernel: tpu_custom_call.1
$region0: #{tpu_custom_call.1}
  #allocation0 [shape = 'u32[]', space=smem, size = 0x4, offset = 0x4, fixed_abs, tag = 'smem constant byte address 0x4 - core index']
  #allocation1 [shape = 'u32[144,128]{1,0:T(1,128)}', space=vmem, size = 0x12000, scoped, tag = 'internal scratch']
  %s0 = inlined_call_operand.hbm [shape: f32[2,1024], index: 0, kind: input, shape index: {}, may-alias: {0,1}]
  %s1 = inlined_call_operand.hbm [shape: f32[2,1024], index: 1, kind: output, shape index: {}, may-alias: {0,1}]
  %s2 = sld [smem:[#allocation0]]
  $region18: #{tpu_custom_call.1} parent=0
    _
  %s4 = ssub.s32 1, %s2
  %s5 = scalar_select 0, %s4, %s2
  $region1: #{tpu_custom_call.1} parent=0
    #allocation2 [shape = 'u8[8192]{0}', space=vmem, size = 0x2000, scoped, tag = 'input window, operand 0, single buffered']
    #allocation3 [shape = 's32[1]{0}', space=sflag, size = 0x4, scoped, tag = 'scoped memory for tpu_custom_call.1']
    #allocation4 [shape = 's32[1]{0}', space=sflag, size = 0x4, scoped, tag = 'scoped memory for tpu_custom_call.1']
    #allocation5 [shape = 'u8[8192]{0}', space=vmem, size = 0x2000, scoped, tag = 'output window, operand 0, single buffered']
    %6 = vsyncpa [#allocation3], 0
    %7 = vsyncpa [#allocation4], 0
    // Predicated region
    $region2: #{tpu_custom_call.1} parent=1 // pred_check
      _
    $region3: #{tpu_custom_call.1} parent=1 // pred_check_branch
      %9 = sbr.rel (0) target = $region5
    $region4: #{tpu_custom_call.1} parent=1 // pred_region
      %s11 = ssub.s32 256, 256
      %12 = vsyncadd [#allocation3], %s11
      %s14 = sshll.u32 [#allocation2], 4
      %s15 = int_to_ptr.vmem [resolvable:$true] %s14
      %17 = dma.hbm_to_vmem [thread:$0]  %s0, 256, %s15, [#allocation3]
    $region5: #{tpu_custom_call.1} parent=1 // pred_fallthru
      _
    // Predicated region
    $region6: #{tpu_custom_call.1} parent=1 // pred_check
      _
    $region7: #{tpu_custom_call.1} parent=1 // pred_check_branch
      %19 = sbr.rel (0) target = $region9
    $region8: #{tpu_custom_call.1} parent=1 // pred_region
      %20 = dma.done [#allocation3], 256
    $region9: #{tpu_custom_call.1} parent=1 // pred_fallthru
      _
    %v21 = vld [vmem:[#allocation2] sm:$0xff]
    %v22 = vld [vmem:[#allocation2 + $0x8] sm:$0xff]
    %v23 = vrcp.pop 10.0
    %v24 = vmul.f32 %v21, %v23
    %v25 = vmul.f32 %v22, %v23
    %v26 = vsub.f32 %v24, 1.0
    %v27 = vsub.f32 %v25, 1.0
    %28 = vst [vmem:[#allocation5] sm:$0xff] %v26
    %29 = vst [vmem:[#allocation5 + $0x8] sm:$0xff] %v27
    // Predicated region
    $region10: #{tpu_custom_call.1} parent=1 // pred_check
      _
    $region11: #{tpu_custom_call.1} parent=1 // pred_check_branch
      %31 = sbr.rel (0) target = $region13
    $region12: #{tpu_custom_call.1} parent=1 // pred_region
      %s33 = ssub.s32 256, 256
      %34 = vsyncadd [#allocation4], %s33
      %s36 = sshll.u32 [#allocation5], 4
      %s37 = int_to_ptr.vmem [resolvable:$true] %s36
      %39 = dma.vmem_to_hbm [thread:$0]  %s37, 256, %s1, [#allocation4]
    $region13: #{tpu_custom_call.1} parent=1 // pred_fallthru
      _
    // Predicated region
    $region14: #{tpu_custom_call.1} parent=1 // pred_check
      _
    $region15: #{tpu_custom_call.1} parent=1 // pred_check_branch
      %41 = sbr.rel (0) target = $region17
    $region16: #{tpu_custom_call.1} parent=1 // pred_region
      %42 = dma.done [#allocation4], 256
    $region17: #{tpu_custom_call.1} parent=1 // pred_fallthru
      _
    %43 = vsyncpa [#allocation3], 1
    %44 = vsyncpa [#allocation4], 1

</llo_original>
